<compile_context>
chip_gen: v7x
topology: tpu7x:2x2x1
jax: 0.10.0
libtpu: 0.0.40
codegen_flags: <defaults>
</compile_context>

<pallas_src>
import functools

import jax
import jax.numpy as jnp
from jax.experimental import pallas as pl
from jax.experimental.pallas import tpu as pltpu

_LANES = 128
_MIB = 1024 * 1024


def _h_swish_kernel(x_ref, o_ref):
    x = x_ref[...]
    # h_sigmoid(x) = relu6(x + 3) / 6 ; h_swish(x) = x * h_sigmoid(x)
    o_ref[...] = (x * (jnp.clip(x + 3.0, 0.0, 6.0) / 6.0)).astype(o_ref.dtype)


def _sublane(dtype) -> int:
    # native sublane packing: 8 for 32-bit, 16 for bf16/f16, 32 for 8-bit
    itemsize = jnp.dtype(dtype).itemsize
    return max(8, 32 // itemsize)


def _round_up(a: int, b: int) -> int:
    return -(-a // b) * b


@functools.lru_cache(maxsize=None)
def _device_params():
    """(target_block_bytes, vmem_limit_bytes, tensorcores_per_device)."""
    kind = ""
    try:
        kind = (jax.devices()[0].device_kind or "").lower()
    except Exception:
        pass
    if "v5 lite" in kind or "v5lite" in kind or "v5e" in kind:
        block = 8 * _MIB       # ~0.82 TB/s HBM: per-step overhead already <4%
        num_tc = 1
    elif "v6" in kind or "trillium" in kind:
        block = 16 * _MIB      # 128 MiB physical VMEM: plenty of headroom
        num_tc = 1
    elif "7" in kind:          # v7x / TPU7x
        block = 12 * _MIB      # 64 MiB VMEM/TC caps live buffers at ~48 MiB
        num_tc = 2
    else:
        block = 8 * _MIB       # conservative default for unknown backends
        num_tc = 1
    # 2 input + 2 output buffers under default double-buffering, plus headroom.
    vmem_limit = 4 * block + 8 * _MIB
    return block, vmem_limit, num_tc


def _choose_tile_rows(rows: int, sub: int, block_bytes: int, itemsize: int,
                      num_tc: int) -> int:
    # Row-tile sized to ~block_bytes, rounded down to the sublane packing.
    tr = max(sub, (block_bytes // (_LANES * itemsize)) // sub * sub)
    if num_tc >= 2:
        # Guarantee at least `num_tc` grid steps so "parallel" can shard
        # row-tiles across both v7x TensorCores.
        tr = min(tr, _round_up(-(-rows // num_tc), sub))
    tr = min(tr, _round_up(rows, sub))
    return max(tr, sub)


def _run_2d(x2d: jax.Array, tile_rows: int, vmem_limit: int) -> jax.Array:
    rows, lanes = x2d.shape
    itemsize = jnp.dtype(x2d.dtype).itemsize
    n = rows * lanes
    return pl.pallas_call(
        _h_swish_kernel,
        out_shape=jax.ShapeDtypeStruct((rows, lanes), x2d.dtype),
        grid_spec=pltpu.PrefetchScalarGridSpec(
            num_scalar_prefetch=0,
            grid=(pl.cdiv(rows, tile_rows),),
            in_specs=[pl.BlockSpec((tile_rows, lanes), lambda i: (i, 0))],
            out_specs=pl.BlockSpec((tile_rows, lanes), lambda i: (i, 0)),
        ),
        compiler_params=pltpu.CompilerParams(
            dimension_semantics=("parallel",),
            vmem_limit_bytes=int(vmem_limit),
        ),
        cost_estimate=pl.CostEstimate(
            flops=5 * n,
            transcendentals=0,
            bytes_accessed=2 * n * itemsize,
        ),
    )(x2d)


def h_swish(x: jax.Array, *, target_block_bytes: int | None = None) -> jax.Array:
    """Elementwise hard-swish. Accepts any shape (e.g. NCHW), any float dtype."""
    orig_shape = x.shape
    dtype = x.dtype
    n = x.size
    if n == 0:
        return x
    itemsize = jnp.dtype(dtype).itemsize
    sub = _sublane(dtype)

    dev_block, vmem_limit, num_tc = _device_params()
    block_bytes = target_block_bytes if target_block_bytes is not None else dev_block
    if target_block_bytes is not None:
        vmem_limit = 4 * block_bytes + 8 * _MIB

    if n % _LANES == 0:
        # Fast path: zero-copy reshape to a lane-dense (rows, 128) slab.
        # rows need NOT be a multiple of the sublane packing: the grid cdiv +
        # BlockSpec mask the ragged last row-block on writeback.
        rows = n // _LANES
        tr = _choose_tile_rows(rows, sub, block_bytes, itemsize, num_tc)
        out2d = _run_2d(x.reshape(rows, _LANES), tr, vmem_limit)
        return out2d.reshape(orig_shape)

    # Slow path (rare: numel not a multiple of 128). Run the kernel on the
    # 128-aligned prefix and compute the <128-element tail with plain jnp,
    # avoiding the old whole-array pad + whole-array slice HBM passes.
    full_rows = n // _LANES
    x_flat = x.reshape(-1)
    tail = x_flat[full_rows * _LANES:]
    tail_out = (tail * (jnp.clip(tail + 3.0, 0.0, 6.0) / 6.0)).astype(dtype)
    if full_rows == 0:
        return tail_out.reshape(orig_shape)
    head = x_flat[: full_rows * _LANES].reshape(full_rows, _LANES)
    tr = _choose_tile_rows(full_rows, sub, block_bytes, itemsize, num_tc)
    head_out = _run_2d(head, tr, vmem_limit).reshape(-1)
    return jnp.concatenate([head_out, tail_out]).reshape(orig_shape)


def _h_swish_ref(x):
    return x * jnp.clip(x + 3.0, 0.0, 6.0) / 6.0


if __name__ == "__main__":
    key = jax.random.PRNGKey(0)

    # NCHW activation, small shape consistent with a conv-net feature map.
    x = jax.random.normal(key, (2, 4, 16, 16), dtype=jnp.float32) * 4.0
    y = jax.block_until_ready(h_swish(x))
    y_ref = _h_swish_ref(x)
    assert y.shape == x.shape and y.dtype == x.dtype
    assert jnp.allclose(y, y_ref, atol=1e-6, rtol=1e-6), "mismatch vs reference"

    # Slow (numel % 128 != 0) path.
    x_odd = jax.random.normal(key, (3, 5, 7), dtype=jnp.float32) * 4.0
    y_odd = jax.block_until_ready(h_swish(x_odd))
    assert jnp.allclose(y_odd, _h_swish_ref(x_odd), atol=1e-6, rtol=1e-6)

    # Fast path with a ragged last row-block (rows not a multiple of 8).
    x_rag = jax.random.normal(key, (3, 128), dtype=jnp.float32) * 4.0
    y_rag = jax.block_until_ready(h_swish(x_rag))
    assert jnp.allclose(y_rag, _h_swish_ref(x_rag), atol=1e-6, rtol=1e-6)

    # bf16 sanity check.
    x_bf = (jax.random.normal(key, (16, 128), dtype=jnp.float32) * 4.0).astype(jnp.bfloat16)
    y_bf = jax.block_until_ready(h_swish(x_bf))
    assert y_bf.dtype == jnp.bfloat16
    assert jnp.allclose(y_bf.astype(jnp.float32),
                        _h_swish_ref(x_bf.astype(jnp.float32)),
                        atol=3e-2, rtol=3e-2)

    print("KERNEL_OK")
</pallas_src>

<mosaic_0001>
module attributes {stable_mosaic.version = 11 : i64} {
  func.func @_h_swish_kernel(%arg0: i32, %arg1: memref<16x128xf32, #tpu.memory_space<vmem>>, %arg2: memref<16x128xf32, #tpu.memory_space<vmem>>) attributes {dimension_semantics = [#tpu.dimension_semantics<parallel>], iteration_bounds = array<i64: 1>, scalar_prefetch = 0 : i64, scratch_operands = 0 : i64, tpu.core_type = #tpu.core_type<tc>, window_params = [{transform_indices = @transform_0, window_bounds = array<i64: 16, 128>}, {transform_indices = @transform_1, window_bounds = array<i64: 16, 128>}]} {
    %c0 = arith.constant 0 : index
    %c0_0 = arith.constant 0 : index
    %0 = vector.load %arg1[%c0, %c0_0] : memref<16x128xf32, #tpu.memory_space<vmem>>, vector<16x128xf32>
    %cst = arith.constant 3.000000e+00 : f32
    %1 = vector.broadcast %cst : f32 to vector<16x128xf32>
    %2 = arith.addf %0, %1 : vector<16x128xf32>
    %cst_1 = arith.constant 0.000000e+00 : f32
    %cst_2 = arith.constant 6.000000e+00 : f32
    %3 = vector.broadcast %cst_1 : f32 to vector<16x128xf32>
    %4 = arith.maximumf %3, %2 : vector<16x128xf32>
    %5 = vector.broadcast %cst_2 : f32 to vector<16x128xf32>
    %6 = arith.minimumf %5, %4 : vector<16x128xf32>
    %cst_3 = arith.constant 6.000000e+00 : f32
    %7 = vector.broadcast %cst_3 : f32 to vector<16x128xf32>
    %8 = arith.divf %6, %7 : vector<16x128xf32>
    %9 = arith.mulf %0, %8 : vector<16x128xf32>
    %c0_4 = arith.constant 0 : index
    %c0_5 = arith.constant 0 : index
    %10 = vector.load %arg2[%c0_4, %c0_5] : memref<16x128xf32, #tpu.memory_space<vmem>>, vector<16x128xf32>
    tpu.vector_store %arg2[%c0_4, %c0_5], %9 {strides = array<i32>} : memref<16x128xf32, #tpu.memory_space<vmem>>, vector<16x128xf32>,
    return
  }
  func.func @transform_0(%arg0: i32) -> (i32, i32) {
    %c0_i32 = arith.constant 0 : i32
    %c0_i32_0 = arith.constant 0 : i32
    return %arg0, %c0_i32 : i32, i32
  }
  func.func @transform_1(%arg0: i32) -> (i32, i32) {
    %c0_i32 = arith.constant 0 : i32
    %c0_i32_0 = arith.constant 0 : i32
    return %arg0, %c0_i32 : i32, i32
  }
}

</mosaic_0001>

<llo_original>
// kernel: tpu_custom_call.1
$region0: #{tpu_custom_call.1}
  #allocation0 [shape = 'u32[]', space=smem, size = 0x4, offset = 0x4, fixed_abs, tag = 'smem constant byte address 0x4 - core index']
  #allocation1 [shape = 'u32[144,128]{1,0:T(1,128)}', space=vmem, size = 0x12000, scoped, tag = 'internal scratch']
  %s0 = inlined_call_operand.hbm [shape: f32[16,128], index: 0, kind: input, shape index: {}]
  %s1 = inlined_call_operand.hbm [shape: f32[16,128], index: 1, kind: output, shape index: {}]
  %s2 = sld [smem:[#allocation0]]
  $region18: #{tpu_custom_call.1} parent=0
    _
  %s4 = ssub.s32 1, %s2
  %s5 = scalar_select 0, %s4, %s2
  $region1: #{tpu_custom_call.1} parent=0
    #allocation2 [shape = 'u8[8192]{0}', space=vmem, size = 0x2000, scoped, tag = 'input window, operand 0, single buffered']
    #allocation3 [shape = 's32[1]{0}', space=sflag, size = 0x4, scoped, tag = 'scoped memory for tpu_custom_call.1']
    #allocation4 [shape = 's32[1]{0}', space=sflag, size = 0x4, scoped, tag = 'scoped memory for tpu_custom_call.1']
    #allocation5 [shape = 'u8[8192]{0}', space=vmem, size = 0x2000, scoped, tag = 'output window, operand 0, single buffered']
    %6 = vsyncpa [#allocation3], 0
    %7 = vsyncpa [#allocation4], 0
    // Predicated region
    $region2: #{tpu_custom_call.1} parent=1 // pred_check
      _
    $region3: #{tpu_custom_call.1} parent=1 // pred_check_branch
      %9 = sbr.rel (0) target = $region5
    $region4: #{tpu_custom_call.1} parent=1 // pred_region
      %s11 = ssub.s32 256, 256
      %12 = vsyncadd [#allocation3], %s11
      %s13 = sshll.u32 [#allocation2], 4
      %s14 = int_to_ptr.vmem [resolvable:$true] %s13
      %19 = dma.hbm_to_vmem [thread:$0]  %s0, 256, %s14, [#allocation3], 128, 128, 8
    $region5: #{tpu_custom_call.1} parent=1 // pred_fallthru
      _
    // Predicated region
    $region6: #{tpu_custom_call.1} parent=1 // pred_check
      _
    $region7: #{tpu_custom_call.1} parent=1 // pred_check_branch
      %21 = sbr.rel (0) target = $region9
    $region8: #{tpu_custom_call.1} parent=1 // pred_region
      %22 = dma.done [#allocation3], 256
    $region9: #{tpu_custom_call.1} parent=1 // pred_fallthru
      _
    %v23 = vld [vmem:[#allocation2] sm:$0xff]
    %v24 = vld [vmem:[#allocation2 + $0x8] sm:$0xff]
    %v25 = vadd.f32 %v23, 3.0
    %v26 = vadd.f32 %v24, 3.0
    %v27 = vmax.f32 %v25, 0.0
    %v28 = vmax.f32 %v26, 0.0
    %v29 = vmin.f32 %v27, 6.0
    %v30 = vmin.f32 %v28, 6.0
    %v31 = vrcp.pop 6.0
    %v32 = vmul.f32 %v29, %v31
    %v33 = vmul.f32 %v30, %v31
    %v34 = vmul.f32 %v23, %v32
    %v35 = vmul.f32 %v24, %v33
    %36 = vst [vmem:[#allocation5] sm:$0xff] %v34
    %37 = vst [vmem:[#allocation5 + $0x8] sm:$0xff] %v35
    // Predicated region
    $region10: #{tpu_custom_call.1} parent=1 // pred_check
      _
    $region11: #{tpu_custom_call.1} parent=1 // pred_check_branch
      %39 = sbr.rel (0) target = $region13
    $region12: #{tpu_custom_call.1} parent=1 // pred_region
      %s41 = ssub.s32 256, 256
      %42 = vsyncadd [#allocation4], %s41
      %s43 = sshll.u32 [#allocation5], 4
      %s44 = int_to_ptr.vmem [resolvable:$true] %s43
      %49 = dma.vmem_to_hbm [thread:$0]  %s44, 256, %s1, [#allocation4], 128, 128, 8
    $region13: #{tpu_custom_call.1} parent=1 // pred_fallthru
      _
    // Predicated region
    $region14: #{tpu_custom_call.1} parent=1 // pred_check
      _
    $region15: #{tpu_custom_call.1} parent=1 // pred_check_branch
      %51 = sbr.rel (0) target = $region17
    $region16: #{tpu_custom_call.1} parent=1 // pred_region
      %52 = dma.done [#allocation4], 256
    $region17: #{tpu_custom_call.1} parent=1 // pred_fallthru
      _
    %53 = vsyncpa [#allocation3], 1
    %54 = vsyncpa [#allocation4], 1

</llo_original>
